<compile_context>
chip_gen: v7x
topology: tpu7x:2x2x1
jax: 0.10.0
libtpu: 0.0.40
codegen_flags: <defaults>
</compile_context>

<pallas_src>
import jax
import jax.numpy as jnp
from jax.experimental import pallas as pl
from jax.experimental.pallas import tpu as pltpu


def _round_up(a, b):
    return (a + b - 1) // b * b


def _swiglu_kernel(x_ref, wg_ref, wv_ref, bg_ref, bv_ref, w3_ref, b3_ref,
                   o_ref, acc_ref):
    # x_ref:   (tm, D)       token-row tile (resident across the H axis)
    # wg_ref:  (D, th)       gate projection tile   (W12[:H].T tile)
    # wv_ref:  (D, th)       value projection tile  (W12[H:].T tile)
    # bg_ref:  (1, th)       gate bias tile
    # bv_ref:  (1, th)       value bias tile
    # w3_ref:  (th, D_out)   output projection tile (W3.T tile)
    # b3_ref:  (1, D_out)    output bias
    # o_ref:   (tm, D_out)   output tile (same block across the H axis)
    # acc_ref: (tm, D_out)   f32 accumulator scratch
    h = pl.program_id(1)

    @pl.when(h == 0)
    def _():
        acc_ref[...] = jnp.zeros_like(acc_ref)

    x = x_ref[...]
    g = jnp.dot(x, wg_ref[...], preferred_element_type=jnp.float32) + bg_ref[...]
    v = jnp.dot(x, wv_ref[...], preferred_element_type=jnp.float32) + bv_ref[...]
    hidden = (g * jax.nn.sigmoid(g)) * v          # SiLU(g) * v, all f32
    acc_ref[...] += jnp.dot(hidden.astype(w3_ref.dtype), w3_ref[...],
                            preferred_element_type=jnp.float32)

    @pl.when(h == pl.num_programs(1) - 1)
    def _():
        o_ref[...] = (acc_ref[...] + b3_ref[...]).astype(o_ref.dtype)


def swiglu_ffn(x, w12, b12, w3, b3, *, tm=256, th=512, weight_dtype=None):
    """SwiGLU FFN forward.

    x:   (..., D_in)
    w12: (2H, D_in), b12: (2H,)   -- PyTorch nn.Linear layout
    w3:  (D_out, H), b3: (D_out,)
    Returns (..., D_out).
    """
    orig_shape = x.shape
    d_in = orig_shape[-1]
    x2d = x.reshape(-1, d_in)
    M = x2d.shape[0]
    two_h = w12.shape[0]
    H = two_h // 2
    d_out = w3.shape[0]

    # --- Split fused W12 into gate/value and pre-transpose to (in, out) ----
    wg_t = w12[:H, :].T                    # (D_in, H)
    wv_t = w12[H:, :].T                    # (D_in, H)
    w3_t = w3.T                            # (H, D_out)
    bg = b12[:H].reshape(1, H)
    bv = b12[H:].reshape(1, H)
    b3_r = b3.reshape(1, d_out)

    if weight_dtype is not None:
        wg_t = wg_t.astype(weight_dtype)
        wv_t = wv_t.astype(weight_dtype)
        w3_t = w3_t.astype(weight_dtype)

    # --- Tile sizes (clamped + padded so shapes always divide evenly) ------
    tm = max(8, min(tm, _round_up(M, 8)))
    tm = _round_up(tm, 8)
    M_pad = _round_up(M, tm)

    th = max(128, min(th, _round_up(H, 128)))
    th = _round_up(th, 128)
    H_pad = _round_up(H, th)

    if M_pad != M:
        x2d = jnp.pad(x2d, ((0, M_pad - M), (0, 0)))
    if H_pad != H:
        dh = H_pad - H
        wg_t = jnp.pad(wg_t, ((0, 0), (0, dh)))
        wv_t = jnp.pad(wv_t, ((0, 0), (0, dh)))
        w3_t = jnp.pad(w3_t, ((0, dh), (0, 0)))
        bg = jnp.pad(bg, ((0, 0), (0, dh)))
        bv = jnp.pad(bv, ((0, 0), (0, dh)))
    # TODO(synk): for production shapes with d_out not a multiple of 128, pad
    # the output projection too so the output stores stay lane-dense.

    grid = (M_pad // tm, H_pad // th)

    wbytes = wg_t.dtype.itemsize
    xbytes = x2d.dtype.itemsize
    cost = pl.CostEstimate(
        flops=2 * M_pad * d_in * 2 * H_pad + 2 * M_pad * H_pad * d_out,
        transcendentals=M_pad * H_pad,
        bytes_accessed=(M_pad * d_in * xbytes
                        + (2 * d_in * H_pad + H_pad * d_out) * wbytes
                        + (2 * H_pad + d_out) * 4
                        + M_pad * d_out * xbytes),
    )

    out = pl.pallas_call(
        _swiglu_kernel,
        out_shape=jax.ShapeDtypeStruct((M_pad, d_out), x.dtype),
        grid_spec=pltpu.PrefetchScalarGridSpec(
            num_scalar_prefetch=0,
            grid=grid,
            in_specs=[
                pl.BlockSpec((tm, d_in), lambda i, h: (i, 0)),     # x tile
                pl.BlockSpec((d_in, th), lambda i, h: (0, h)),     # W_gate tile
                pl.BlockSpec((d_in, th), lambda i, h: (0, h)),     # W_val tile
                pl.BlockSpec((1, th), lambda i, h: (0, h)),        # b_gate tile
                pl.BlockSpec((1, th), lambda i, h: (0, h)),        # b_val tile
                pl.BlockSpec((th, d_out), lambda i, h: (h, 0)),    # W3 tile
                pl.BlockSpec((1, d_out), lambda i, h: (0, 0)),     # b3
            ],
            out_specs=pl.BlockSpec((tm, d_out), lambda i, h: (i, 0)),
            scratch_shapes=[pltpu.VMEM((tm, d_out), jnp.float32)],
        ),
        compiler_params=pltpu.CompilerParams(
            dimension_semantics=("parallel", "arbitrary"),
        ),
        cost_estimate=cost,
    )(x2d, wg_t, wv_t, bg, bv, w3_t, b3_r)

    if M_pad != M:
        out = out[:M]
    return out.reshape(*orig_shape[:-1], d_out)


if __name__ == "__main__":
    # Small shapes: batch=2, seq=8, in_features=32 -> hidden=128 (4x), out=32
    batch, seq, d_in = 2, 8, 32
    hidden = 4 * d_in
    d_out = d_in

    key = jax.random.PRNGKey(0)
    kx, kw12, kb12, kw3, kb3 = jax.random.split(key, 5)

    x = jax.random.normal(kx, (batch, seq, d_in), dtype=jnp.float32)
    # Deterministic "Linear" parameters (PyTorch layout: weight (out, in)).
    w12 = jax.random.normal(kw12, (2 * hidden, d_in), dtype=jnp.float32) * 0.05
    b12 = jax.random.normal(kb12, (2 * hidden,), dtype=jnp.float32) * 0.05
    w3 = jax.random.normal(kw3, (d_out, hidden), dtype=jnp.float32) * 0.05
    b3 = jax.random.normal(kb3, (d_out,), dtype=jnp.float32) * 0.05

    out = swiglu_ffn(x, w12, b12, w3, b3)
    out = jax.block_until_ready(out)

    # Pure-JAX reference check.
    x12_ref = x @ w12.T + b12
    x1, x2 = jnp.split(x12_ref, 2, axis=-1)
    ref = (jax.nn.silu(x1) * x2) @ w3.T + b3
    assert out.shape == (batch, seq, d_out)
    assert jnp.allclose(out, ref, atol=1e-4, rtol=1e-4), "mismatch vs reference"

    print("KERNEL_OK")
</pallas_src>

<mosaic_0001>
module attributes {stable_mosaic.version = 11 : i64} {
  func.func @_swiglu_kernel(%arg0: i32, %arg1: i32, %arg2: memref<16x32xf32, #tpu.memory_space<vmem>>, %arg3: memref<32x128xf32, #tpu.memory_space<vmem>>, %arg4: memref<32x128xf32, #tpu.memory_space<vmem>>, %arg5: memref<1x128xf32, #tpu.memory_space<vmem>>, %arg6: memref<1x128xf32, #tpu.memory_space<vmem>>, %arg7: memref<128x32xf32, #tpu.memory_space<vmem>>, %arg8: memref<1x32xf32, #tpu.memory_space<vmem>>, %arg9: memref<16x32xf32, #tpu.memory_space<vmem>>, %arg10: memref<16x32xf32, #tpu.memory_space<vmem>>) attributes {dimension_semantics = [#tpu.dimension_semantics<parallel>, #tpu.dimension_semantics<arbitrary>], iteration_bounds = array<i64: 1, 1>, scalar_prefetch = 0 : i64, scratch_operands = 1 : i64, tpu.core_type = #tpu.core_type<tc>, window_params = [{transform_indices = @transform_0, window_bounds = array<i64: 16, 32>}, {transform_indices = @transform_1, window_bounds = array<i64: 32, 128>}, {transform_indices = @transform_2, window_bounds = array<i64: 32, 128>}, {transform_indices = @transform_3, window_bounds = array<i64: 1, 128>}, {transform_indices = @transform_4, window_bounds = array<i64: 1, 128>}, {transform_indices = @transform_5, window_bounds = array<i64: 128, 32>}, {pipeline_mode = #tpu.pipeline_mode<synchronous>, transform_indices = @transform_6, window_bounds = array<i64: 1, 32>}, {transform_indices = @transform_7, window_bounds = array<i64: 16, 32>}]} {
    %c0_i32 = arith.constant 0 : i32
    %0 = arith.cmpi eq, %arg1, %c0_i32 : i32
    %1 = arith.extui %0 : i1 to i32
    %c0_i32_0 = arith.constant 0 : i32
    %2 = arith.cmpi ne, %1, %c0_i32_0 : i32
    scf.if %2 {
      %cst_21 = arith.constant 0.000000e+00 : f32
      %29 = vector.broadcast %cst_21 : f32 to vector<16x32xf32>
      %c0_22 = arith.constant 0 : index
      %c0_23 = arith.constant 0 : index
      %30 = vector.load %arg10[%c0_22, %c0_23] : memref<16x32xf32, #tpu.memory_space<vmem>>, vector<16x32xf32>
      tpu.vector_store %arg10[%c0_22, %c0_23], %29 {strides = array<i32>} : memref<16x32xf32, #tpu.memory_space<vmem>>, vector<16x32xf32>,
    } else {
    }
    %c0 = arith.constant 0 : index
    %c0_1 = arith.constant 0 : index
    %3 = vector.load %arg2[%c0, %c0_1] : memref<16x32xf32, #tpu.memory_space<vmem>>, vector<16x32xf32>
    %c0_2 = arith.constant 0 : index
    %c0_3 = arith.constant 0 : index
    %4 = vector.load %arg3[%c0_2, %c0_3] : memref<32x128xf32, #tpu.memory_space<vmem>>, vector<32x128xf32>
    %cst = arith.constant dense<0.000000e+00> : vector<16x128xf32>
    %5 = tpu.matmul %3, %4, %cst {dimension_numbers = #tpu.dot_dimension_numbers<[1], [0], [0], [1], [0, 0, 1, 1], [], []>} : vector<16x32xf32>, vector<32x128xf32>, vector<16x128xf32> -> vector<16x128xf32>
    %c0_4 = arith.constant 0 : index
    %c0_5 = arith.constant 0 : index
    %6 = vector.load %arg5[%c0_4, %c0_5] : memref<1x128xf32, #tpu.memory_space<vmem>>, vector<1x128xf32>
    %7 = vector.broadcast %6 : vector<1x128xf32> to vector<16x128xf32>
    %8 = arith.addf %5, %7 : vector<16x128xf32>
    %c0_6 = arith.constant 0 : index
    %c0_7 = arith.constant 0 : index
    %9 = vector.load %arg4[%c0_6, %c0_7] : memref<32x128xf32, #tpu.memory_space<vmem>>, vector<32x128xf32>
    %cst_8 = arith.constant dense<0.000000e+00> : vector<16x128xf32>
    %10 = tpu.matmul %3, %9, %cst_8 {dimension_numbers = #tpu.dot_dimension_numbers<[1], [0], [0], [1], [0, 0, 1, 1], [], []>} : vector<16x32xf32>, vector<32x128xf32>, vector<16x128xf32> -> vector<16x128xf32>
    %c0_9 = arith.constant 0 : index
    %c0_10 = arith.constant 0 : index
    %11 = vector.load %arg6[%c0_9, %c0_10] : memref<1x128xf32, #tpu.memory_space<vmem>>, vector<1x128xf32>
    %12 = vector.broadcast %11 : vector<1x128xf32> to vector<16x128xf32>
    %13 = arith.addf %10, %12 : vector<16x128xf32>
    %14 = arith.negf %8 : vector<16x128xf32>
    %15 = math.exp %14 : vector<16x128xf32>
    %cst_11 = arith.constant 1.000000e+00 : f32
    %16 = vector.broadcast %cst_11 : f32 to vector<16x128xf32>
    %17 = arith.addf %16, %15 : vector<16x128xf32>
    %18 = arith.divf %16, %17 : vector<16x128xf32>
    %19 = arith.mulf %8, %18 : vector<16x128xf32>
    %20 = arith.mulf %19, %13 : vector<16x128xf32>
    %c0_12 = arith.constant 0 : index
    %c0_13 = arith.constant 0 : index
    %21 = vector.load %arg10[%c0_12, %c0_13] : memref<16x32xf32, #tpu.memory_space<vmem>>, vector<16x32xf32>
    %c0_14 = arith.constant 0 : index
    %c0_15 = arith.constant 0 : index
    %22 = vector.load %arg7[%c0_14, %c0_15] : memref<128x32xf32, #tpu.memory_space<vmem>>, vector<128x32xf32>
    %cst_16 = arith.constant dense<0.000000e+00> : vector<16x32xf32>
    %23 = tpu.matmul %20, %22, %cst_16 {dimension_numbers = #tpu.dot_dimension_numbers<[1], [0], [0], [1], [0, 0, 1, 1], [], []>} : vector<16x128xf32>, vector<128x32xf32>, vector<16x32xf32> -> vector<16x32xf32>
    %24 = arith.addf %21, %23 : vector<16x32xf32>
    %c0_17 = arith.constant 0 : index
    %c0_18 = arith.constant 0 : index
    %25 = vector.load %arg10[%c0_17, %c0_18] : memref<16x32xf32, #tpu.memory_space<vmem>>, vector<16x32xf32>
    tpu.vector_store %arg10[%c0_17, %c0_18], %24 {strides = array<i32>} : memref<16x32xf32, #tpu.memory_space<vmem>>, vector<16x32xf32>,
    %c0_i32_19 = arith.constant 0 : i32
    %26 = arith.cmpi eq, %arg1, %c0_i32_19 : i32
    %27 = arith.extui %26 : i1 to i32
    %c0_i32_20 = arith.constant 0 : i32
    %28 = arith.cmpi ne, %27, %c0_i32_20 : i32
    scf.if %28 {
      %c0_21 = arith.constant 0 : index
      %c0_22 = arith.constant 0 : index
      %29 = vector.load %arg10[%c0_21, %c0_22] : memref<16x32xf32, #tpu.memory_space<vmem>>, vector<16x32xf32>
      %c0_23 = arith.constant 0 : index
      %c0_24 = arith.constant 0 : index
      %30 = vector.load %arg8[%c0_23, %c0_24] : memref<1x32xf32, #tpu.memory_space<vmem>>, vector<1x32xf32>
      %31 = vector.broadcast %30 : vector<1x32xf32> to vector<16x32xf32>
      %32 = arith.addf %29, %31 : vector<16x32xf32>
      %c0_25 = arith.constant 0 : index
      %c0_26 = arith.constant 0 : index
      %33 = vector.load %arg9[%c0_25, %c0_26] : memref<16x32xf32, #tpu.memory_space<vmem>>, vector<16x32xf32>
      tpu.vector_store %arg9[%c0_25, %c0_26], %32 {strides = array<i32>} : memref<16x32xf32, #tpu.memory_space<vmem>>, vector<16x32xf32>,
    } else {
    }
    return
  }
  func.func @transform_0(%arg0: i32, %arg1: i32) -> (i32, i32) {
    %c0_i32 = arith.constant 0 : i32
    %c0_i32_0 = arith.constant 0 : i32
    return %arg0, %c0_i32 : i32, i32
  }
  func.func @transform_1(%arg0: i32, %arg1: i32) -> (i32, i32) {
    %c0_i32 = arith.constant 0 : i32
    %c0_i32_0 = arith.constant 0 : i32
    return %c0_i32, %arg1 : i32, i32
  }
  func.func @transform_2(%arg0: i32, %arg1: i32) -> (i32, i32) {
    %c0_i32 = arith.constant 0 : i32
    %c0_i32_0 = arith.constant 0 : i32
    return %c0_i32, %arg1 : i32, i32
  }
  func.func @transform_3(%arg0: i32, %arg1: i32) -> (i32, i32) {
    %c0_i32 = arith.constant 0 : i32
    %c0_i32_0 = arith.constant 0 : i32
    return %c0_i32, %arg1 : i32, i32
  }
  func.func @transform_4(%arg0: i32, %arg1: i32) -> (i32, i32) {
    %c0_i32 = arith.constant 0 : i32
    %c0_i32_0 = arith.constant 0 : i32
    return %c0_i32, %arg1 : i32, i32
  }
  func.func @transform_5(%arg0: i32, %arg1: i32) -> (i32, i32) {
    %c0_i32 = arith.constant 0 : i32
    %c0_i32_0 = arith.constant 0 : i32
    return %arg1, %c0_i32 : i32, i32
  }
  func.func @transform_6(%arg0: i32, %arg1: i32) -> (i32, i32) {
    %c0_i32 = arith.constant 0 : i32
    %c0_i32_0 = arith.constant 0 : i32
    %c0_i32_1 = arith.constant 0 : i32
    return %c0_i32, %c0_i32_0 : i32, i32
  }
  func.func @transform_7(%arg0: i32, %arg1: i32) -> (i32, i32) {
    %c0_i32 = arith.constant 0 : i32
    %c0_i32_0 = arith.constant 0 : i32
    return %arg0, %c0_i32 : i32, i32
  }
}

</mosaic_0001>

<llo_original>
// kernel: tpu_custom_call.1
$region0: #{tpu_custom_call.1}
  #allocation0 [shape = 'u32[]', space=smem, size = 0x4, offset = 0x4, fixed_abs, tag = 'smem constant byte address 0x4 - core index']
  #allocation1 [shape = 'u32[144,128]{1,0:T(1,128)}', space=vmem, size = 0x12000, scoped, tag = 'internal scratch']
  #allocation2 [shape = 'f32[16,32]{1,0:T(8,128)}', space=vmem, size = 0x2000, scoped, tag = 'scratch operand']
  %s0 = inlined_call_operand.vmem [shape: f32[16,32], index: 0, kind: input, shape index: {}]
  %s1 = inlined_call_operand.vmem [shape: f32[32,128], index: 1, kind: input, shape index: {}]
  %s2 = inlined_call_operand.vmem [shape: f32[32,128], index: 2, kind: input, shape index: {}]
  %s3 = inlined_call_operand.vmem [shape: f32[1,128], index: 3, kind: input, shape index: {}]
  %s4 = inlined_call_operand.vmem [shape: f32[1,128], index: 4, kind: input, shape index: {}]
  %s5 = inlined_call_operand.vmem [shape: f32[128,32], index: 5, kind: input, shape index: {}]
  %s6 = inlined_call_operand.vmem [shape: f32[1,32], index: 6, kind: input, shape index: {}]
  %s7 = inlined_call_operand.hbm [shape: f32[16,32], index: 7, kind: output, shape index: {}]
  %s8 = sld [smem:[#allocation0]]
  $region46: #{tpu_custom_call.1} parent=0
    _
  %s10 = ssub.s32 1, %s8
  %s11 = scalar_select 0, %s10, %s8
  $region1: #{tpu_custom_call.1} parent=0
    #allocation3 [shape = 'u8[8192]{0}', space=vmem, size = 0x2000, scoped, tag = 'output window, operand 0, single buffered']
    #allocation4 [shape = 's32[1]{0}', space=sflag, size = 0x4, scoped, tag = 'scoped memory for tpu_custom_call.1']
    %12 = vsyncpa [#allocation4], 0
    // Predicated region
    $region2: #{tpu_custom_call.1} parent=1 // pred_check
      _
    $region3: #{tpu_custom_call.1} parent=1 // pred_check_branch
      %14 = sbr.rel (0) target = $region5
    $region4: #{tpu_custom_call.1} parent=1 // pred_region
      _
    $region5: #{tpu_custom_call.1} parent=1 // pred_fallthru
      _
    // Predicated region
    $region6: #{tpu_custom_call.1} parent=1 // pred_check
      _
    $region7: #{tpu_custom_call.1} parent=1 // pred_check_branch
      %16 = sbr.rel (0) target = $region9
    $region8: #{tpu_custom_call.1} parent=1 // pred_region
      _
    $region9: #{tpu_custom_call.1} parent=1 // pred_fallthru
      _
    // Predicated region
    $region10: #{tpu_custom_call.1} parent=1 // pred_check
      _
    $region11: #{tpu_custom_call.1} parent=1 // pred_check_branch
      %18 = sbr.rel (0) target = $region13
    $region12: #{tpu_custom_call.1} parent=1 // pred_region
      _
    $region13: #{tpu_custom_call.1} parent=1 // pred_fallthru
      _
    // Predicated region
    $region14: #{tpu_custom_call.1} parent=1 // pred_check
      _
    $region15: #{tpu_custom_call.1} parent=1 // pred_check_branch
      %20 = sbr.rel (0) target = $region17
    $region16: #{tpu_custom_call.1} parent=1 // pred_region
      _
    $region17: #{tpu_custom_call.1} parent=1 // pred_fallthru
      _
    // Predicated region
    $region18: #{tpu_custom_call.1} parent=1 // pred_check
      _
    $region19: #{tpu_custom_call.1} parent=1 // pred_check_branch
      %22 = sbr.rel (0) target = $region21
    $region20: #{tpu_custom_call.1} parent=1 // pred_region
      _
    $region21: #{tpu_custom_call.1} parent=1 // pred_fallthru
      _
    // Predicated region
    $region22: #{tpu_custom_call.1} parent=1 // pred_check
      _
    $region23: #{tpu_custom_call.1} parent=1 // pred_check_branch
      %24 = sbr.rel (0) target = $region25
    $region24: #{tpu_custom_call.1} parent=1 // pred_region
      _
    $region25: #{tpu_custom_call.1} parent=1 // pred_fallthru
      _
    // Predicated region
    $region26: #{tpu_custom_call.1} parent=1 // pred_check
      _
    $region27: #{tpu_custom_call.1} parent=1 // pred_check_branch
      %26 = sbr.rel (0) target = $region29
    $region28: #{tpu_custom_call.1} parent=1 // pred_region
      _
    $region29: #{tpu_custom_call.1} parent=1 // pred_fallthru
      _
    %p27 = scmp.eq.s32.totalorder 0, 0
    // Predicated region
    $region30: #{tpu_custom_call.1} parent=1 // pred_check
      %p28 = pneg %p27
    $region31: #{tpu_custom_call.1} parent=1 // pred_check_branch
      %30 = sbr.rel (%p28) target = $region33
    $region32: #{tpu_custom_call.1} parent=1 // pred_region
      %vm31 = vcmask 261120
      %32 = vst.msk [vmem:[#allocation2] sm:$0xff] %vm31, 0.0
      %33 = vst.msk [vmem:[#allocation2 + $0x8] sm:$0xff] %vm31, 0.0
    $region33: #{tpu_custom_call.1} parent=1 // pred_fallthru
      _
    %v34 = vld [vmem:[%s0] sm:$0xff]
    %v35 = vld [vmem:[%s0 + $0x8] sm:$0xff]
    %v36 = vld [vmem:[%s1] sm:$0xff]
    %v37 = vld [vmem:[%s1 + $0x8] sm:$0xff]
    %v38 = vld [vmem:[%s1 + $0x10] sm:$0xff]
    %v39 = vld [vmem:[%s1 + $0x18] sm:$0xff]
    %v40 = vld [vmem:[%s3] sm:$0x1]
    %v42 = vlaneseq
    %v43 = vshrl.u32 %v42, 7
    %v44 = vsub.s32 0, %v43
    %v45 = vrot.slane %v40, %v44
    %vm47 = vcmask 261120
    %v49 = vsel %vm47, %v34, 0
    %v52 = vsel %vm47, %v35, 0
    %54 = vmatprep.subr.mxu0 0.0
    %55 = vmatpush1.msra.mxu0 %v36
    %56 = vmatprep.subr.mxu0 0.0
    %57 = vmatpush1.msra.mxu0 %v37
    %58 = vmatprep.subr.mxu0 0.0
    %59 = vmatpush1.msra.mxu0 %v38
    %60 = vmatprep.subr.mxu0 0.0
    %61 = vmatpush1.msra.mxu0 %v39
    %62 = vmatprep.subr.mxu0 0.0
    %63 = vmatpush1.msra.mxu0 0.0
    %64 = vmatprep.subr.mxu0 0.0
    %65 = vmatpush1.msra.mxu0 0.0
    %66 = vmatprep.subr.mxu0 0.0
    %67 = vmatpush1.msra.mxu0 0.0
    %68 = vmatprep.subr.mxu0 0.0
    %69 = vmatpush1.msra.mxu0 0.0
    %70 = vmatprep.subr.mxu0 0.0
    %71 = vmatpush1.msra.mxu0 0.0
    %72 = vmatprep.subr.mxu0 0.0
    %73 = vmatpush1.msra.mxu0 0.0
    %74 = vmatprep.subr.mxu0 0.0
    %75 = vmatpush1.msra.mxu0 0.0
    %76 = vmatprep.subr.mxu0 0.0
    %77 = vmatpush1.msra.mxu0 0.0
    %78 = vmatprep.subr.mxu0 0.0
    %79 = vmatpush1.msra.mxu0 0.0
    %80 = vmatprep.subr.mxu0 0.0
    %81 = vmatpush1.msra.mxu0 0.0
    %82 = vmatprep.subr.mxu0 0.0
    %83 = vmatpush1.msra.mxu0 0.0
    %84 = vmatprep.subr.mxu0 0.0
    %85 = vmatpush1.msra.mxu0 0.0
    %86 = vmatprep.subr.mxu0 0.0
    %87 = vmatpush1.msra.mxu0 0.0
    %88 = vmatprep.subr.mxu0 0.0
    %89 = vmatpush1.msra.mxu0 0.0
    %90 = vmatprep.subr.mxu0 0.0
    %91 = vmatpush1.msra.mxu0 0.0
    %92 = vmatprep.subr.mxu0 0.0
    %93 = vmatpush1.msra.mxu0 0.0
    %94 = vmatprep.subr.mxu0 0.0
    %95 = vmatpush1.msra.mxu0 0.0
    %96 = vmatprep.subr.mxu0 0.0
    %97 = vmatpush1.msra.mxu0 0.0
    %98 = vmatprep.subr.mxu0 0.0
    %99 = vmatpush1.msra.mxu0 0.0
    %100 = vmatprep.subr.mxu0 0.0
    %101 = vmatpush1.msra.mxu0 0.0
    %102 = vmatprep.subr.mxu0 0.0
    %103 = vmatpush1.msra.mxu0 0.0
    %104 = vmatprep.subr.mxu0 0.0
    %105 = vmatpush1.msra.mxu0 0.0
    %106 = vmatprep.subr.mxu0 0.0
    %107 = vmatpush1.msra.mxu0 0.0
    %108 = vmatprep.subr.mxu0 0.0
    %109 = vmatpush1.msra.mxu0 0.0
    %110 = vmatprep.subr.mxu0 0.0
    %111 = vmatpush1.msra.mxu0 0.0
    %112 = vmatprep.subr.mxu0 0.0
    %113 = vmatpush1.msra.mxu0 0.0
    %114 = vmatprep.subr.mxu0 0.0
    %115 = vmatpush1.msra.mxu0 0.0
    %116 = vmatprep.subr.mxu0 0.0
    %117 = vmatpush1.msra.mxu0 0.0
    %118 = vmatprep.mubr.f32.mxu0 0.0
    %119 = vmatmul.mubr.f32.gmra.mrb[0].mxu0 %v49
    %v120 = vpop.f32.mrb[0].mxu0
    %v121 = vadd.f32 %v45, %v120
    %v122 = vpop.f32.mrb[0].mxu0
    %123 = vmatprep.mubr.f32.mxu0 0.0
    %124 = vmatmul.mubr.f32.gmra.mrb[0].mxu0 %v52
    %v125 = vpop.f32.mrb[0].mxu0
    %v126 = vadd.f32 %v45, %v125
    %v127 = vpop.f32.mrb[0].mxu0
    %128 = vdwg.mxu0
    %v129 = vld [vmem:[%s2] sm:$0xff]
    %v130 = vld [vmem:[%s2 + $0x8] sm:$0xff]
    %v131 = vld [vmem:[%s2 + $0x10] sm:$0xff]
    %v132 = vld [vmem:[%s2 + $0x18] sm:$0xff]
    %v133 = vld [vmem:[%s4] sm:$0x1]
    %v135 = vlaneseq
    %v136 = vshrl.u32 %v135, 7
    %v137 = vsub.s32 0, %v136
    %v138 = vrot.slane %v133, %v137
    %140 = vmatprep.subr.mxu0 0.0
    %141 = vmatpush1.msra.mxu0 %v129
    %142 = vmatprep.subr.mxu0 0.0
    %143 = vmatpush1.msra.mxu0 %v130
    %144 = vmatprep.subr.mxu0 0.0
    %145 = vmatpush1.msra.mxu0 %v131
    %146 = vmatprep.subr.mxu0 0.0
    %147 = vmatpush1.msra.mxu0 %v132
    %148 = vmatprep.subr.mxu0 0.0
    %149 = vmatpush1.msra.mxu0 0.0
    %150 = vmatprep.subr.mxu0 0.0
    %151 = vmatpush1.msra.mxu0 0.0
    %152 = vmatprep.subr.mxu0 0.0
    %153 = vmatpush1.msra.mxu0 0.0
    %154 = vmatprep.subr.mxu0 0.0
    %155 = vmatpush1.msra.mxu0 0.0
    %156 = vmatprep.subr.mxu0 0.0
    %157 = vmatpush1.msra.mxu0 0.0
    %158 = vmatprep.subr.mxu0 0.0
    %159 = vmatpush1.msra.mxu0 0.0
    %160 = vmatprep.subr.mxu0 0.0
    %161 = vmatpush1.msra.mxu0 0.0
    %162 = vmatprep.subr.mxu0 0.0
    %163 = vmatpush1.msra.mxu0 0.0
    %164 = vmatprep.subr.mxu0 0.0
    %165 = vmatpush1.msra.mxu0 0.0
    %166 = vmatprep.subr.mxu0 0.0
    %167 = vmatpush1.msra.mxu0 0.0
    %168 = vmatprep.subr.mxu0 0.0
    %169 = vmatpush1.msra.mxu0 0.0
    %170 = vmatprep.subr.mxu0 0.0
    %171 = vmatpush1.msra.mxu0 0.0
    %172 = vmatprep.subr.mxu0 0.0
    %173 = vmatpush1.msra.mxu0 0.0
    %174 = vmatprep.subr.mxu0 0.0
    %175 = vmatpush1.msra.mxu0 0.0
    %176 = vmatprep.subr.mxu0 0.0
    %177 = vmatpush1.msra.mxu0 0.0
    %178 = vmatprep.subr.mxu0 0.0
    %179 = vmatpush1.msra.mxu0 0.0
    %180 = vmatprep.subr.mxu0 0.0
    %181 = vmatpush1.msra.mxu0 0.0
    %182 = vmatprep.subr.mxu0 0.0
    %183 = vmatpush1.msra.mxu0 0.0
    %184 = vmatprep.subr.mxu0 0.0
    %185 = vmatpush1.msra.mxu0 0.0
    %186 = vmatprep.subr.mxu0 0.0
    %187 = vmatpush1.msra.mxu0 0.0
    %188 = vmatprep.subr.mxu0 0.0
    %189 = vmatpush1.msra.mxu0 0.0
    %190 = vmatprep.subr.mxu0 0.0
    %191 = vmatpush1.msra.mxu0 0.0
    %192 = vmatprep.subr.mxu0 0.0
    %193 = vmatpush1.msra.mxu0 0.0
    %194 = vmatprep.subr.mxu0 0.0
    %195 = vmatpush1.msra.mxu0 0.0
    %196 = vmatprep.subr.mxu0 0.0
    %197 = vmatpush1.msra.mxu0 0.0
    %198 = vmatprep.subr.mxu0 0.0
    %199 = vmatpush1.msra.mxu0 0.0
    %200 = vmatprep.subr.mxu0 0.0
    %201 = vmatpush1.msra.mxu0 0.0
    %202 = vmatprep.subr.mxu0 0.0
    %203 = vmatpush1.msra.mxu0 0.0
    %204 = vmatprep.mubr.f32.mxu0 0.0
    %205 = vmatmul.mubr.f32.gmra.mrb[0].mxu0 %v49
    %v206 = vpop.f32.mrb[0].mxu0
    %v207 = vadd.f32 %v138, %v206
    %v208 = vpop.f32.mrb[0].mxu0
    %209 = vmatprep.mubr.f32.mxu0 0.0
    %210 = vmatmul.mubr.f32.gmra.mrb[0].mxu0 %v52
    %v211 = vpop.f32.mrb[0].mxu0
    %v212 = vadd.f32 %v138, %v211
    %v213 = vpop.f32.mrb[0].mxu0
    %214 = vdwg.mxu0
    %v215 = vxor.u32 %v121, 2147483648
    %v216 = vxor.u32 %v126, 2147483648
    %v217 = vmul.f32 %v215, 1.442695
    %v218 = vpow.pop %v217
    %v219 = vmul.f32 %v216, 1.442695
    %v220 = vpow.pop %v219
    %v221 = vadd.f32 %v218, 1.0
    %v222 = vadd.f32 %v220, 1.0
    %v223 = vrcp.pop %v221
    %v224 = vmul.f32 1.0, %v223
    %v225 = vrcp.pop %v222
    %v226 = vmul.f32 1.0, %v225
    %v227 = vmul.f32 %v121, %v224
    %v228 = vmul.f32 %v126, %v226
    %v229 = vmul.f32 %v227, %v207
    %v230 = vmul.f32 %v228, %v212
    %v231 = vld [vmem:[#allocation2] sm:$0xff]
    %v232 = vld [vmem:[#allocation2 + $0x8] sm:$0xff]
    %v233 = vld [vmem:[%s5] sm:$0xff]
    %v234 = vld [vmem:[%s5 + $0x8] sm:$0xff]
    %v235 = vld [vmem:[%s5 + $0x10] sm:$0xff]
    %v236 = vld [vmem:[%s5 + $0x18] sm:$0xff]
    %v237 = vld [vmem:[%s5 + $0x20] sm:$0xff]
    %v238 = vld [vmem:[%s5 + $0x28] sm:$0xff]
    %v239 = vld [vmem:[%s5 + $0x30] sm:$0xff]
    %v240 = vld [vmem:[%s5 + $0x38] sm:$0xff]
    %v241 = vld [vmem:[%s5 + $0x40] sm:$0xff]
    %v242 = vld [vmem:[%s5 + $0x48] sm:$0xff]
    %v243 = vld [vmem:[%s5 + $0x50] sm:$0xff]
    %v244 = vld [vmem:[%s5 + $0x58] sm:$0xff]
    %v245 = vld [vmem:[%s5 + $0x60] sm:$0xff]
    %v246 = vld [vmem:[%s5 + $0x68] sm:$0xff]
    %v247 = vld [vmem:[%s5 + $0x70] sm:$0xff]
    %v248 = vld [vmem:[%s5 + $0x78] sm:$0xff]
    %249 = vmatprep.subr.mxu0 0.0
    %250 = vmatpush1.msra.mxu0 %v233
    %251 = vmatprep.subr.mxu0 0.0
    %252 = vmatpush1.msra.mxu0 %v234
    %253 = vmatprep.subr.mxu0 0.0
    %254 = vmatpush1.msra.mxu0 %v235
    %255 = vmatprep.subr.mxu0 0.0
    %256 = vmatpush1.msra.mxu0 %v236
    %257 = vmatprep.subr.mxu0 0.0
    %258 = vmatpush1.msra.mxu0 %v237
    %259 = vmatprep.subr.mxu0 0.0
    %260 = vmatpush1.msra.mxu0 %v238
    %261 = vmatprep.subr.mxu0 0.0
    %262 = vmatpush1.msra.mxu0 %v239
    %263 = vmatprep.subr.mxu0 0.0
    %264 = vmatpush1.msra.mxu0 %v240
    %265 = vmatprep.subr.mxu0 0.0
    %266 = vmatpush1.msra.mxu0 %v241
    %267 = vmatprep.subr.mxu0 0.0
    %268 = vmatpush1.msra.mxu0 %v242
    %269 = vmatprep.subr.mxu0 0.0
    %270 = vmatpush1.msra.mxu0 %v243
    %271 = vmatprep.subr.mxu0 0.0
    %272 = vmatpush1.msra.mxu0 %v244
    %273 = vmatprep.subr.mxu0 0.0
    %274 = vmatpush1.msra.mxu0 %v245
    %275 = vmatprep.subr.mxu0 0.0
    %276 = vmatpush1.msra.mxu0 %v246
    %277 = vmatprep.subr.mxu0 0.0
    %278 = vmatpush1.msra.mxu0 %v247
    %279 = vmatprep.subr.mxu0 0.0
    %280 = vmatpush1.msra.mxu0 %v248
    %281 = vmatprep.subr.mxu0 0.0
    %282 = vmatpush1.msra.mxu0 0.0
    %283 = vmatprep.subr.mxu0 0.0
    %284 = vmatpush1.msra.mxu0 0.0
    %285 = vmatprep.subr.mxu0 0.0
    %286 = vmatpush1.msra.mxu0 0.0
    %287 = vmatprep.subr.mxu0 0.0
    %288 = vmatpush1.msra.mxu0 0.0
    %289 = vmatprep.subr.mxu0 0.0
    %290 = vmatpush1.msra.mxu0 0.0
    %291 = vmatprep.subr.mxu0 0.0
    %292 = vmatpush1.msra.mxu0 0.0
    %293 = vmatprep.subr.mxu0 0.0
    %294 = vmatpush1.msra.mxu0 0.0
    %295 = vmatprep.subr.mxu0 0.0
    %296 = vmatpush1.msra.mxu0 0.0
    %297 = vmatprep.subr.mxu0 0.0
    %298 = vmatpush1.msra.mxu0 0.0
    %299 = vmatprep.subr.mxu0 0.0
    %300 = vmatpush1.msra.mxu0 0.0
    %301 = vmatprep.subr.mxu0 0.0
    %302 = vmatpush1.msra.mxu0 0.0
    %303 = vmatprep.subr.mxu0 0.0
    %304 = vmatpush1.msra.mxu0 0.0
    %305 = vmatprep.subr.mxu0 0.0
    %306 = vmatpush1.msra.mxu0 0.0
    %307 = vmatprep.subr.mxu0 0.0
    %308 = vmatpush1.msra.mxu0 0.0
    %309 = vmatprep.subr.mxu0 0.0
    %310 = vmatpush1.msra.mxu0 0.0
    %311 = vmatprep.subr.mxu0 0.0
    %312 = vmatpush1.msra.mxu0 0.0
    %313 = vmatprep.mubr.f32.mxu0 0.0
    %314 = vmatmul.mubr.f32.gmra.mrb[0].mxu0 %v229
    %v315 = vpop.f32.mrb[0].mxu0
    %v316 = vadd.f32 0.0, %v315
    %v317 = vpop.f32.mrb[0].mxu0
    %318 = vmatprep.mubr.f32.mxu0 0.0
    %319 = vmatmul.mubr.f32.gmra.mrb[0].mxu0 %v230
    %v320 = vpop.f32.mrb[0].mxu0
    %v321 = vadd.f32 0.0, %v320
    %v322 = vpop.f32.mrb[0].mxu0
    %323 = vdwg.mxu0
    %v324 = vadd.f32 %v231, %v316
    %v325 = vadd.f32 %v232, %v321
    %326 = vst.msk [vmem:[#allocation2] sm:$0xff] %vm47, %v324
    %327 = vst.msk [vmem:[#allocation2 + $0x8] sm:$0xff] %vm47, %v325
    // Predicated region
    $region34: #{tpu_custom_call.1} parent=1 // pred_check
      %p328 = pneg %p27
    $region35: #{tpu_custom_call.1} parent=1 // pred_check_branch
      %330 = sbr.rel (%p328) target = $region37
    $region36: #{tpu_custom_call.1} parent=1 // pred_region
      %v331 = vld [vmem:[#allocation2] sm:$0xff]
      %v332 = vld [vmem:[#allocation2 + $0x8] sm:$0xff]
      %v333 = vld [vmem:[%s6] sm:$0x1]
      %v335 = vlaneseq
      %v336 = vshrl.u32 %v335, 7
      %v337 = vsub.s32 0, %v336
      %v338 = vrot.slane %v333, %v337
      %v340 = vadd.f32 %v331, %v338
      %v341 = vadd.f32 %v332, %v338
      %342 = vst.msk [vmem:[#allocation3] sm:$0xff] %vm47, %v340
      %343 = vst.msk [vmem:[#allocation3 + $0x8] sm:$0xff] %vm47, %v341
    $region37: #{tpu_custom_call.1} parent=1 // pred_fallthru
      _
    // Predicated region
    $region38: #{tpu_custom_call.1} parent=1 // pred_check
      _
    $region39: #{tpu_custom_call.1} parent=1 // pred_check_branch
      %345 = sbr.rel (0) target = $region41
    $region40: #{tpu_custom_call.1} parent=1 // pred_region
      %s347 = ssub.s32 256, 256
      %348 = vsyncadd [#allocation4], %s347
      %s349 = sshll.u32 [#allocation3], 4
      %s350 = int_to_ptr.vmem [resolvable:$true] %s349
      %355 = dma.vmem_to_hbm [thread:$0]  %s350, 256, %s7, [#allocation4], 128, 128, 8
    $region41: #{tpu_custom_call.1} parent=1 // pred_fallthru
      _
    // Predicated region
    $region42: #{tpu_custom_call.1} parent=1 // pred_check
      _
    $region43: #{tpu_custom_call.1} parent=1 // pred_check_branch
      %357 = sbr.rel (0) target = $region45
    $region44: #{tpu_custom_call.1} parent=1 // pred_region
      %358 = dma.done [#allocation4], 256
    $region45: #{tpu_custom_call.1} parent=1 // pred_fallthru
      _
    %359 = vsyncpa [#allocation4], 1

</llo_original>
